<compile_context>
chip_gen: v5e
topology: v5e:2x2
jax: 0.10.0
libtpu: 0.0.40
codegen_flags: <defaults>
</compile_context>

<pallas_src>
import jax
import jax.numpy as jnp
from jax.experimental import pallas as pl
from jax.experimental.pallas import tpu as pltpu

D = 300  # fixed by the module: w has shape [300, 1]


def predictor_kernel(x_ref, w_ref, y_ref):
    # x_ref: (tb, C, D) -- channel selects are cheap sublane-strided reads that
    # sit in otherwise-idle VPU/XLU slots (kernel is DMA-bound).
    x0 = x_ref[:, 0, :].astype(jnp.float32)
    x1 = x_ref[:, 1, :].astype(jnp.float32)
    x2 = x_ref[:, 2, :].astype(jnp.float32)
    v = x1 + x2 - x0                                      # (tb, D)  VPU adds

    w_row = w_ref[...].astype(jnp.float32)                # (1, D)   lane-dense
    # Projection onto the unit vector w: VPU multiply + XLU lane reduction
    # (avoids an N=1 MXU matvec that would waste the systolic array).
    proj = jnp.sum(v * w_row, axis=-1, keepdims=True)     # (tb, 1)
    # y = v - (v.w) w^T : rank-1 removal, broadcasted VPU mul/sub.
    y_ref[...] = (v - proj * w_row).astype(y_ref.dtype)


def _pick_batch_tile(B):
    # Small B: one block (no dispatch overhead to amortize, nothing to shard).
    if B <= 256:
        return B
    # Medium B: split roughly in half (sublane-aligned) so the parallel batch
    # axis gives >= 2 blocks and both TensorCores are fed on v7x.
    if B <= 1024:
        return ((B + 1) // 2 + 7) // 8 * 8
    # Large B: 512-row tiles reach ~85% of HBM roofline and the double-buffered
    # working set (~14 MiB with the (C->8, D->384) pads) fits every chip's
    # scoped-VMEM budget, including v5e's 16 MiB default.
    return 512


def predictor_forward(x, w):
    B, C, d = x.shape
    assert C >= 3 and d == D

    # Only layout plumbing in the wrapper: w lane-dense (1, D) (1.2 KB, free).
    # x is passed through untouched -- no extra HBM pass.
    w_row = jnp.reshape(w, (1, D))

    tb = _pick_batch_tile(B)
    nb = pl.cdiv(B, tb)  # partial tail block is masked on store -> any B works

    cost = pl.CostEstimate(
        flops=6 * B * D,                              # v, projection, rank-1 sub
        transcendentals=0,
        bytes_accessed=4 * (B * C * D + D + B * D),   # x + w + y (f32 equivalent)
    )

    return pl.pallas_call(
        predictor_kernel,
        out_shape=jax.ShapeDtypeStruct((B, D), x.dtype),
        grid=(nb,),
        in_specs=[
            pl.BlockSpec((tb, C, D), lambda i: (i, 0, 0),
                         memory_space=pltpu.MemorySpace.VMEM),
            pl.BlockSpec((1, D), lambda i: (0, 0),
                         memory_space=pltpu.MemorySpace.VMEM),
        ],
        out_specs=pl.BlockSpec((tb, D), lambda i: (i, 0),
                               memory_space=pltpu.MemorySpace.VMEM),
        compiler_params=pltpu.CompilerParams(
            dimension_semantics=("parallel",),   # batch blocks shard across TCs
            vmem_limit_bytes=48 * 1024 * 1024,   # headroom for tb=512 everywhere
        ),
        cost_estimate=cost,
    )(x, w_row)


def reference_forward(x, w):
    v = x[:, 1, :] + x[:, 2, :] - x[:, 0, :]
    return v - jnp.matmul(jnp.matmul(v, w), w.T)


if __name__ == "__main__":
    key = jax.random.PRNGKey(0)
    k_w, k_x = jax.random.split(key)

    # Deterministic parameter init matching the module's __init__:
    #   init = randn([300, 1]); w = init / norm(init)
    init = jax.random.normal(k_w, (D, 1), dtype=jnp.float32)
    w = init / jnp.linalg.norm(init)

    # Small example input consistent with forward: 3 channels, D=300 features.
    B = 4
    x = jax.random.normal(k_x, (B, 3, D), dtype=jnp.float32)

    y = predictor_forward(x, w)
    y = jax.block_until_ready(y)

    y_ref = reference_forward(x, w)
    assert y.shape == (B, D)
    assert jnp.allclose(y, y_ref, atol=1e-5, rtol=1e-5), "mismatch vs reference"

    print("KERNEL_OK")
</pallas_src>

<mosaic_0001>
module attributes {stable_mosaic.version = 11 : i64} {
  func.func @predictor_kernel(%arg0: i32, %arg1: memref<4x3x300xf32, #tpu.memory_space<vmem>>, %arg2: memref<1x300xf32, #tpu.memory_space<vmem>>, %arg3: memref<4x300xf32, #tpu.memory_space<vmem>>) attributes {dimension_semantics = [#tpu.dimension_semantics<parallel>], iteration_bounds = array<i64: 1>, scalar_prefetch = 0 : i64, scratch_operands = 0 : i64, tpu.core_type = #tpu.core_type<tc>, window_params = [{transform_indices = @transform_0, window_bounds = array<i64: 4, 3, 300>}, {pipeline_mode = #tpu.pipeline_mode<synchronous>, transform_indices = @transform_1, window_bounds = array<i64: 1, 300>}, {transform_indices = @transform_2, window_bounds = array<i64: 4, 300>}]} {
    %c0 = arith.constant 0 : index
    %c0_0 = arith.constant 0 : index
    %c0_1 = arith.constant 0 : index
    %0 = vector.load %arg1[%c0, %c0_0, %c0_1] : memref<4x3x300xf32, #tpu.memory_space<vmem>>, vector<4x1x300xf32>
    %1 = vector.shape_cast %0 : vector<4x1x300xf32> to vector<4x300xf32>
    %c0_2 = arith.constant 0 : index
    %c1 = arith.constant 1 : index
    %c0_3 = arith.constant 0 : index
    %2 = vector.load %arg1[%c0_2, %c1, %c0_3] : memref<4x3x300xf32, #tpu.memory_space<vmem>>, vector<4x1x300xf32>
    %3 = vector.shape_cast %2 : vector<4x1x300xf32> to vector<4x300xf32>
    %c0_4 = arith.constant 0 : index
    %c2 = arith.constant 2 : index
    %c0_5 = arith.constant 0 : index
    %4 = vector.load %arg1[%c0_4, %c2, %c0_5] : memref<4x3x300xf32, #tpu.memory_space<vmem>>, vector<4x1x300xf32>
    %5 = vector.shape_cast %4 : vector<4x1x300xf32> to vector<4x300xf32>
    %6 = arith.addf %3, %5 : vector<4x300xf32>
    %7 = arith.subf %6, %1 : vector<4x300xf32>
    %c0_6 = arith.constant 0 : index
    %c0_7 = arith.constant 0 : index
    %8 = vector.load %arg2[%c0_6, %c0_7] : memref<1x300xf32, #tpu.memory_space<vmem>>, vector<1x300xf32>
    %9 = vector.broadcast %8 : vector<1x300xf32> to vector<4x300xf32>
    %10 = arith.mulf %7, %9 : vector<4x300xf32>
    %cst = arith.constant dense<0.000000e+00> : vector<4xf32>
    %11 = vector.multi_reduction <add>, %10, %cst [1] : vector<4x300xf32> to vector<4xf32>
    %12 = vector.shape_cast %11 : vector<4xf32> to vector<4x1xf32>
    %13 = vector.broadcast %12 : vector<4x1xf32> to vector<4x300xf32>
    %14 = vector.broadcast %8 : vector<1x300xf32> to vector<4x300xf32>
    %15 = arith.mulf %13, %14 : vector<4x300xf32>
    %16 = arith.subf %7, %15 : vector<4x300xf32>
    %c0_8 = arith.constant 0 : index
    %c0_9 = arith.constant 0 : index
    %17 = vector.load %arg3[%c0_8, %c0_9] : memref<4x300xf32, #tpu.memory_space<vmem>>, vector<4x300xf32>
    tpu.vector_store %arg3[%c0_8, %c0_9], %16 {strides = array<i32>} : memref<4x300xf32, #tpu.memory_space<vmem>>, vector<4x300xf32>,
    return
  }
  func.func @transform_0(%arg0: i32) -> (i32, i32, i32) {
    %c0_i32 = arith.constant 0 : i32
    %c0_i32_0 = arith.constant 0 : i32
    %c0_i32_1 = arith.constant 0 : i32
    return %arg0, %c0_i32, %c0_i32_0 : i32, i32, i32
  }
  func.func @transform_1(%arg0: i32) -> (i32, i32) {
    %c0_i32 = arith.constant 0 : i32
    %c0_i32_0 = arith.constant 0 : i32
    %c0_i32_1 = arith.constant 0 : i32
    return %c0_i32, %c0_i32_0 : i32, i32
  }
  func.func @transform_2(%arg0: i32) -> (i32, i32) {
    %c0_i32 = arith.constant 0 : i32
    %c0_i32_0 = arith.constant 0 : i32
    return %arg0, %c0_i32 : i32, i32
  }
}

</mosaic_0001>

<llo_original>
// kernel: tpu_custom_call.1
$region0: #{tpu_custom_call.1}
  #allocation0 [shape = 'u32[]', space=smem, size = 0x4, offset = 0x4, fixed_abs, tag = 'smem constant byte address 0x4 - core index']
  #allocation1 [shape = 'u32[72,128]{1,0:T(1,128)}', space=vmem, size = 0x9000, scoped, tag = 'internal scratch']
  %s0 = inlined_call_operand.vmem [shape: f32[4,3,300], index: 0, kind: input, shape index: {}]
  %s1 = inlined_call_operand.vmem [shape: f32[1,300], index: 1, kind: input, shape index: {}]
  %s2 = inlined_call_operand.hbm [shape: f32[4,300], index: 2, kind: output, shape index: {}]
  %s3 = sld [smem:[#allocation0]]
  $region18: #{tpu_custom_call.1} parent=0
    _
  %s5 = ssub.s32 1, %s3
  %s6 = scalar_select 0, %s5, %s3
  $region1: #{tpu_custom_call.1} parent=0
    #allocation2 [shape = 'u8[6144]{0}', space=vmem, size = 0x1800, scoped, tag = 'output window, operand 0, single buffered']
    #allocation3 [shape = 's32[1]{0}', space=sflag, size = 0x4, scoped, tag = 'scoped memory for tpu_custom_call.1']
    %7 = vsyncpa [#allocation3], 0
    // Predicated region
    $region2: #{tpu_custom_call.1} parent=1 // pred_check
      _
    $region3: #{tpu_custom_call.1} parent=1 // pred_check_branch
      %9 = sbr.rel (0) target = $region5
    $region4: #{tpu_custom_call.1} parent=1 // pred_region
      _
    $region5: #{tpu_custom_call.1} parent=1 // pred_fallthru
      _
    // Predicated region
    $region6: #{tpu_custom_call.1} parent=1 // pred_check
      _
    $region7: #{tpu_custom_call.1} parent=1 // pred_check_branch
      %11 = sbr.rel (0) target = $region9
    $region8: #{tpu_custom_call.1} parent=1 // pred_region
      _
    $region9: #{tpu_custom_call.1} parent=1 // pred_fallthru
      _
    %v12 = vld [vmem:[%s0] ss:$4 sm:$0x7]
    %s13 = scalar_lea.vmem %s0, 12
    %v14 = vld [vmem:[%s13] ss:$4 sm:$0x7]
    %s15 = scalar_lea.vmem %s0, 24
    %v16 = vld [vmem:[%s15] ss:$4 sm:$0x7]
    %s17 = scalar_lea.vmem %s0, 36
    %v18 = vld [vmem:[%s17] ss:$4 sm:$0x7]
    %s19 = scalar_lea.vmem %s0, 1
    %v20 = vld [vmem:[%s19] ss:$4 sm:$0x7]
    %s21 = scalar_lea.vmem %s0, 13
    %v22 = vld [vmem:[%s21] ss:$4 sm:$0x7]
    %s23 = scalar_lea.vmem %s0, 25
    %v24 = vld [vmem:[%s23] ss:$4 sm:$0x7]
    %s25 = scalar_lea.vmem %s0, 37
    %v26 = vld [vmem:[%s25] ss:$4 sm:$0x7]
    %s27 = scalar_lea.vmem %s0, 2
    %v28 = vld [vmem:[%s27] ss:$4 sm:$0x7]
    %s29 = scalar_lea.vmem %s0, 14
    %v30 = vld [vmem:[%s29] ss:$4 sm:$0x7]
    %s31 = scalar_lea.vmem %s0, 26
    %v32 = vld [vmem:[%s31] ss:$4 sm:$0x7]
    %s33 = scalar_lea.vmem %s0, 38
    %v34 = vld [vmem:[%s33] ss:$4 sm:$0x7]
    %v35 = vadd.f32 %v20, %v28
    %v36 = vadd.f32 %v22, %v30
    %v37 = vadd.f32 %v24, %v32
    %v38 = vadd.f32 %v26, %v34
    %v39 = vsub.f32 %v35, %v12
    %v40 = vsub.f32 %v36, %v14
    %v41 = vsub.f32 %v37, %v16
    %v42 = vsub.f32 %v38, %v18
    %v43 = vld [vmem:[%s1] sm:$0x7]
    %v45 = vperm.slane %v43, 0
    %v46 = vperm.slane %v43, 1
    %v47 = vperm.slane %v43, 2
    %v51 = vrot.slane %v46, 7
    %v52 = vrot.slane %v47, 6
    %vm53 = vcmask 1040384
    %v54 = vsel %vm53, %v45, %v51
    %vm55 = vcmask 1041408
    %v56 = vsel %vm55, %v54, %v52
    %vm57 = vcmask 1041409
    %v58 = vsel %vm57, %v45, %v51
    %vm59 = vcmask 1042433
    %v60 = vsel %vm59, %v58, %v52
    %v61 = vrot.slane %v60, 1
    %vm62 = vcmask 1042434
    %v63 = vsel %vm62, %v45, %v51
    %vm64 = vcmask 1043458
    %v65 = vsel %vm64, %v63, %v52
    %v66 = vrot.slane %v65, 2
    %vm67 = vcmask 1043459
    %v68 = vsel %vm67, %v45, %v51
    %vm69 = vcmask 1044483
    %v70 = vsel %vm69, %v68, %v52
    %v71 = vrot.slane %v70, 3
    %v76 = vmul.f32 %v39, %v56
    %v77 = vmul.f32 %v40, %v61
    %v78 = vmul.f32 %v41, %v66
    %v79 = vmul.f32 %v42, %v71
    %84 = vst [vmem:[#allocation1] ss:$9 sm:$0xff] %v76
    %s85 = scalar_lea.vmem [#allocation1], 1
    %86 = vst [vmem:[%s85] ss:$9 sm:$0xff] %v77
    %s87 = scalar_lea.vmem [#allocation1], 2
    %88 = vst [vmem:[%s87] ss:$9 sm:$0xff] %v78
    %s89 = scalar_lea.vmem [#allocation1], 3
    %90 = vst [vmem:[%s89] ss:$9 sm:$0xff] %v79
    %v91 = vld [vmem:[#allocation1] sm:$0xff]
    %v92 = vld [vmem:[#allocation1 + $0x9] sm:$0xff]
    %v93 = vld [vmem:[#allocation1 + $0x12] sm:$0xff]
    %vm97 = vcmask 1043456
    %v98 = vsel %vm97, %v91, 0.0
    %v99 = vsel %vm97, %v92, 0.0
    %v100 = vadd.f32 %v98, %v99
    %vm101 = vcmask 355328
    %v102 = vsel %vm101, %v93, 0.0
    %v103 = vadd.f32 %v100, %v102
    %104 = vadd.xlane.f32.xlu0 %v103
    %v105 = vpop.xlane.xlu0 %104
    %v106 = vmul.f32 %v105, %v45
    %v107 = vmul.f32 %v105, %v46
    %v108 = vmul.f32 %v105, %v47
    %v112 = vrot.slane %v107, 7
    %v113 = vrot.slane %v108, 6
    %v114 = vsel %vm53, %v106, %v112
    %v115 = vsel %vm55, %v114, %v113
    %v116 = vsel %vm57, %v106, %v112
    %v117 = vsel %vm59, %v116, %v113
    %v118 = vrot.slane %v117, 1
    %v119 = vsel %vm62, %v106, %v112
    %v120 = vsel %vm64, %v119, %v113
    %v121 = vrot.slane %v120, 2
    %v122 = vsel %vm67, %v106, %v112
    %v123 = vsel %vm69, %v122, %v113
    %v124 = vrot.slane %v123, 3
    %v129 = vsub.f32 %v39, %v115
    %v130 = vsub.f32 %v40, %v118
    %v131 = vsub.f32 %v41, %v121
    %v132 = vsub.f32 %v42, %v124
    %137 = vst [vmem:[#allocation1] ss:$4 sm:$0xff] %v129
    %s138 = scalar_lea.vmem [#allocation1], 1
    %139 = vst [vmem:[%s138] ss:$4 sm:$0xff] %v130
    %s140 = scalar_lea.vmem [#allocation1], 2
    %141 = vst [vmem:[%s140] ss:$4 sm:$0xff] %v131
    %s142 = scalar_lea.vmem [#allocation1], 3
    %143 = vst [vmem:[%s142] ss:$4 sm:$0xff] %v132
    %v144 = vld [vmem:[#allocation1] sm:$0xff]
    %v145 = vld [vmem:[#allocation1 + $0x8] sm:$0xff]
    %148 = vst [vmem:[#allocation2] sm:$0xff] %v144
    %149 = vst.msk [vmem:[#allocation2 + $0x8] sm:$0xf] %vm101, %v145
    // Predicated region
    $region10: #{tpu_custom_call.1} parent=1 // pred_check
      _
    $region11: #{tpu_custom_call.1} parent=1 // pred_check_branch
      %151 = sbr.rel (0) target = $region13
    $region12: #{tpu_custom_call.1} parent=1 // pred_region
      %153 = vsyncadd [#allocation3], 0
      %s155 = sshll.u32 [#allocation2], 4
      %s156 = int_to_ptr.vmem [resolvable:$true] %s155
      %s157 = sshll.u32 %s2, 4
      %s158 = int_to_ptr.hbm [resolvable:$true] %s157
      %160 = dma.vmem_to_hbm [thread:$0]  %s156, 192, %s158, [#allocation3]
    $region13: #{tpu_custom_call.1} parent=1 // pred_fallthru
      _
    // Predicated region
    $region14: #{tpu_custom_call.1} parent=1 // pred_check
      _
    $region15: #{tpu_custom_call.1} parent=1 // pred_check_branch
      %162 = sbr.rel (0) target = $region17
    $region16: #{tpu_custom_call.1} parent=1 // pred_region
      %164 = dma.done [#allocation3], 192
    $region17: #{tpu_custom_call.1} parent=1 // pred_fallthru
      _
    %165 = vsyncpa [#allocation3], 1

</llo_original>
